<compile_context>
chip_gen: v7x
topology: tpu7x:2x2x1
jax: 0.10.0
libtpu: 0.0.40
codegen_flags: <defaults>
</compile_context>

<pallas_src>
import functools

import jax
import jax.numpy as jnp
from jax.experimental import pallas as pl
from jax.experimental.pallas import tpu as pltpu

LANE = 128
SUBLANE = 8


def _round_up(x, m):
    return ((x + m - 1) // m) * m


def _pad_to(a, shape):
    return jnp.pad(a, [(0, s - d) for d, s in zip(a.shape, shape)])


# ----------------------------- Pallas kernel ------------------------------ #
def mlp_kernel(xt_ref, w1t_ref, w2t_ref, w3t_ref, b_ref, o_ref):
    """Transposed-layout MLP: the batch lives on the lane axis.

    xt_ref : (d_in, tb)     f32  input tile (batch on lanes)
    w1t_ref: (wp, d_in)     f32  W1^T (hidden dim zero-padded to 128)
    w2t_ref: (wp, wp)       f32  W2^T
    w3t_ref: (d_out_p, wp)  f32  W3^T
    b_ref  : (bp_rows, 3)   f32  packed bias columns [b1 | b2 | b3] (zero-padded)
    o_ref  : (d_out_p, tb)  f32  output tile (batch on lanes)
    """
    wp = w1t_ref.shape[0]
    d_out_p = o_ref.shape[0]

    b1 = b_ref[0:wp, 0:1]          # (wp, 1) -> broadcast along lanes
    b2 = b_ref[0:wp, 1:2]
    b3 = b_ref[0:d_out_p, 2:3]     # (d_out_p, 1)

    # Layer 1: (wp, d_in) @ (d_in, tb) -> (wp, tb), f32 accumulation + ReLU.
    h = jnp.dot(w1t_ref[...], xt_ref[...], preferred_element_type=jnp.float32)
    h = jnp.maximum(h + b1, 0.0)

    # Layer 2 (Dropout(p=0) == Identity in the torch module).
    h = jnp.dot(w2t_ref[...], h, preferred_element_type=jnp.float32)
    h = jnp.maximum(h + b2, 0.0)

    # Output layer (no activation). Only the true d_out rows are materialized.
    y = jnp.dot(w3t_ref[...], h, preferred_element_type=jnp.float32)
    o_ref[...] = (y + b3).astype(o_ref.dtype)


# --------------------- one-time parameter preparation ---------------------- #
def prepare_params(params, *, operand_dtype=jnp.float32):
    """Hoisted out of the per-call path: pad, transpose, and pack the weights
    once. Weights are stored as W^T so the kernel runs in transposed layout."""
    w1, b1 = params["w1"], params["b1"]   # w: [in, out], b: [1, out]
    w2, b2 = params["w2"], params["b2"]
    w3, b3 = params["w3"], params["b3"]
    d_in = w1.shape[0]
    d_h1, d_h2, d_out = w1.shape[1], w2.shape[1], w3.shape[1]

    wp = max(LANE, _round_up(max(d_h1, d_h2), LANE))   # padded hidden width
    d_out_p = _round_up(d_out, SUBLANE)                # padded output rows

    w1t = _pad_to(w1.T, (wp, d_in)).astype(operand_dtype)      # (wp, d_in)
    w2t = _pad_to(w2.T, (wp, wp)).astype(operand_dtype)        # (wp, wp)
    w3t = _pad_to(w3.T, (d_out_p, wp)).astype(operand_dtype)   # (d_out_p, wp)

    bp_rows = max(wp, d_out_p)
    b_pack = jnp.concatenate(
        [_pad_to(b1.T, (bp_rows, 1)),
         _pad_to(b2.T, (bp_rows, 1)),
         _pad_to(b3.T, (bp_rows, 1))], axis=1).astype(jnp.float32)  # (bp_rows, 3)

    return dict(w1t=w1t, w2t=w2t, w3t=w3t, b_pack=b_pack,
                d_in=d_in, d_out=d_out, wp=wp, d_out_p=d_out_p)


# ------------------------------ JAX wrapper -------------------------------- #
def _choose_tb(B, tile_b):
    if B < 256:
        return _round_up(max(B, 1), LANE)              # one clean grid step
    if B <= 2 * tile_b:
        return _round_up(pl.cdiv(B, 2), LANE)          # >=2 steps -> v7x megacore
    return _round_up(tile_b, LANE)


def mlp_forward(x, prep, *, tile_b=1024):
    """x: [B, d_in] float32. prep: output of prepare_params()."""
    B, d_in = x.shape
    assert d_in == prep["d_in"]
    wp, d_out, d_out_p = prep["wp"], prep["d_out"], prep["d_out_p"]
    w1t, w2t, w3t, b_pack = prep["w1t"], prep["w2t"], prep["w3t"], prep["b_pack"]
    bp_rows = b_pack.shape[0]

    tb = _choose_tb(B, tile_b)
    Bp = _round_up(B, tb)

    # Only per-call transform of x: transpose (+ batch pad on the lane axis).
    x_t = x.T
    if Bp != B:
        x_t = jnp.pad(x_t, ((0, 0), (0, Bp - B)))
    x_t = x_t.astype(w1t.dtype)   # no-op for f32 operands

    grid = (Bp // tb,)
    full = lambda shape: pl.BlockSpec(shape, lambda i: (0, 0))

    out_t = pl.pallas_call(
        mlp_kernel,
        out_shape=jax.ShapeDtypeStruct((d_out_p, Bp), jnp.float32),
        grid=grid,
        in_specs=[
            pl.BlockSpec((d_in, tb), lambda i: (0, i)),   # x_t tile (batch on lanes)
            full((wp, d_in)),                             # W1^T
            full((wp, wp)),                               # W2^T
            full((d_out_p, wp)),                          # W3^T
            full((bp_rows, 3)),                           # packed bias columns
        ],
        out_specs=pl.BlockSpec((d_out_p, tb), lambda i: (0, i)),
        compiler_params=pltpu.CompilerParams(
            dimension_semantics=("parallel",),            # megacore on v7x
        ),
    )(x_t, w1t, w2t, w3t, b_pack)

    # Cheap epilogue: (d_out_p, Bp) is only 8 rows of f32. Restore [B, d_out].
    return out_t[:d_out, :B].T


# ------------------------- deterministic param init ------------------------ #
def init_params(key, input_size, width, depth, output_size):
    """Kaiming-uniform-ish init analogous to nn.Linear defaults, deterministic."""
    layers = [input_size] + [width] * depth + [output_size]
    params = {}
    ks = jax.random.split(key, 2 * (len(layers) - 1))
    for idx in range(len(layers) - 1):
        fan_in, fan_out = layers[idx], layers[idx + 1]
        bound = 1.0 / jnp.sqrt(fan_in)
        # store W already transposed torch->math: [in, out]
        w = jax.random.uniform(ks[2 * idx], (fan_in, fan_out),
                               minval=-bound, maxval=bound, dtype=jnp.float32)
        b = jax.random.uniform(ks[2 * idx + 1], (1, fan_out),
                               minval=-bound, maxval=bound, dtype=jnp.float32)
        params[f"w{idx + 1}"] = w
        params[f"b{idx + 1}"] = b
    return params


# -------------------------------- reference -------------------------------- #
def mlp_ref_f32(x, p):
    """Pure f32 reference matching the torch module semantics."""
    h = jnp.maximum(x @ p["w1"] + p["b1"], 0.0)
    h = jnp.maximum(h @ p["w2"] + p["b2"], 0.0)
    return h @ p["w3"] + p["b3"]


if __name__ == "__main__":
    INPUT_SIZE, WIDTH, DEPTH, OUTPUT_SIZE = 16, 32, 2, 8

    key = jax.random.PRNGKey(0)
    k_x, k_p, k_x2, k_x3 = jax.random.split(key, 4)
    params = init_params(k_p, INPUT_SIZE, WIDTH, DEPTH, OUTPUT_SIZE)

    prep = prepare_params(params)           # one-time padding / transposition
    fwd = jax.jit(functools.partial(mlp_forward, prep=prep))

    # Case 1: small batch -> single grid step.
    x = jax.random.normal(k_x, (16, INPUT_SIZE), dtype=jnp.float32)
    out = jax.block_until_ready(fwd(x))
    assert out.shape == (16, OUTPUT_SIZE)
    assert jnp.allclose(out, mlp_ref_f32(x, params), atol=5e-2, rtol=5e-2), \
        "mismatch vs f32 reference (B=16)"

    # Case 2: batch not a multiple of the lane width -> batch-pad + slice path.
    x2 = jax.random.normal(k_x2, (20, INPUT_SIZE), dtype=jnp.float32)
    out2 = jax.block_until_ready(fwd(x2))
    assert out2.shape == (20, OUTPUT_SIZE)
    assert jnp.allclose(out2, mlp_ref_f32(x2, params), atol=5e-2, rtol=5e-2), \
        "mismatch vs f32 reference (B=20)"

    # Case 3: B >= 256 -> at least 2 grid steps (exercises the megacore path).
    x3 = jax.random.normal(k_x3, (260, INPUT_SIZE), dtype=jnp.float32)
    out3 = jax.block_until_ready(fwd(x3))
    assert out3.shape == (260, OUTPUT_SIZE)
    assert jnp.allclose(out3, mlp_ref_f32(x3, params), atol=5e-2, rtol=5e-2), \
        "mismatch vs f32 reference (B=260)"

    print("KERNEL_OK")
</pallas_src>

<mosaic_0001>
module attributes {stable_mosaic.version = 11 : i64} {
  func.func @mlp_kernel(%arg0: i32, %arg1: memref<16x128xf32, #tpu.memory_space<vmem>>, %arg2: memref<128x16xf32, #tpu.memory_space<vmem>>, %arg3: memref<128x128xf32, #tpu.memory_space<vmem>>, %arg4: memref<8x128xf32, #tpu.memory_space<vmem>>, %arg5: memref<128x3xf32, #tpu.memory_space<vmem>>, %arg6: memref<8x128xf32, #tpu.memory_space<vmem>>) attributes {dimension_semantics = [#tpu.dimension_semantics<parallel>], iteration_bounds = array<i64: 1>, scalar_prefetch = 0 : i64, scratch_operands = 0 : i64, tpu.core_type = #tpu.core_type<tc>, window_params = [{transform_indices = @transform_0, window_bounds = array<i64: 16, 128>}, {pipeline_mode = #tpu.pipeline_mode<synchronous>, transform_indices = @transform_1, window_bounds = array<i64: 128, 16>}, {pipeline_mode = #tpu.pipeline_mode<synchronous>, transform_indices = @transform_2, window_bounds = array<i64: 128, 128>}, {pipeline_mode = #tpu.pipeline_mode<synchronous>, transform_indices = @transform_3, window_bounds = array<i64: 8, 128>}, {pipeline_mode = #tpu.pipeline_mode<synchronous>, transform_indices = @transform_4, window_bounds = array<i64: 128, 3>}, {transform_indices = @transform_5, window_bounds = array<i64: 8, 128>}]} {
    %c0 = arith.constant 0 : index
    %c0_0 = arith.constant 0 : index
    %0 = vector.load %arg5[%c0, %c0_0] : memref<128x3xf32, #tpu.memory_space<vmem>>, vector<128x1xf32>
    %c0_1 = arith.constant 0 : index
    %c1 = arith.constant 1 : index
    %1 = vector.load %arg5[%c0_1, %c1] : memref<128x3xf32, #tpu.memory_space<vmem>>, vector<128x1xf32>
    %c0_2 = arith.constant 0 : index
    %c2 = arith.constant 2 : index
    %2 = vector.load %arg5[%c0_2, %c2] : memref<128x3xf32, #tpu.memory_space<vmem>>, vector<8x1xf32>
    %c0_3 = arith.constant 0 : index
    %c0_4 = arith.constant 0 : index
    %3 = vector.load %arg2[%c0_3, %c0_4] : memref<128x16xf32, #tpu.memory_space<vmem>>, vector<128x16xf32>
    %c0_5 = arith.constant 0 : index
    %c0_6 = arith.constant 0 : index
    %4 = vector.load %arg1[%c0_5, %c0_6] : memref<16x128xf32, #tpu.memory_space<vmem>>, vector<16x128xf32>
    %cst = arith.constant dense<0.000000e+00> : vector<128x128xf32>
    %5 = tpu.matmul %3, %4, %cst {dimension_numbers = #tpu.dot_dimension_numbers<[1], [0], [0], [1], [0, 0, 1, 1], [], []>} : vector<128x16xf32>, vector<16x128xf32>, vector<128x128xf32> -> vector<128x128xf32>
    %6 = vector.broadcast %0 : vector<128x1xf32> to vector<128x128xf32>
    %7 = arith.addf %5, %6 : vector<128x128xf32>
    %cst_7 = arith.constant 0.000000e+00 : f32
    %8 = vector.broadcast %cst_7 : f32 to vector<128x128xf32>
    %9 = arith.maximumf %7, %8 : vector<128x128xf32>
    %c0_8 = arith.constant 0 : index
    %c0_9 = arith.constant 0 : index
    %10 = vector.load %arg3[%c0_8, %c0_9] : memref<128x128xf32, #tpu.memory_space<vmem>>, vector<128x128xf32>
    %cst_10 = arith.constant dense<0.000000e+00> : vector<128x128xf32>
    %11 = tpu.matmul %10, %9, %cst_10 {dimension_numbers = #tpu.dot_dimension_numbers<[1], [0], [0], [1], [0, 0, 1, 1], [], []>} : vector<128x128xf32>, vector<128x128xf32>, vector<128x128xf32> -> vector<128x128xf32>
    %12 = vector.broadcast %1 : vector<128x1xf32> to vector<128x128xf32>
    %13 = arith.addf %11, %12 : vector<128x128xf32>
    %cst_11 = arith.constant 0.000000e+00 : f32
    %14 = vector.broadcast %cst_11 : f32 to vector<128x128xf32>
    %15 = arith.maximumf %13, %14 : vector<128x128xf32>
    %c0_12 = arith.constant 0 : index
    %c0_13 = arith.constant 0 : index
    %16 = vector.load %arg4[%c0_12, %c0_13] : memref<8x128xf32, #tpu.memory_space<vmem>>, vector<8x128xf32>
    %cst_14 = arith.constant dense<0.000000e+00> : vector<8x128xf32>
    %17 = tpu.matmul %16, %15, %cst_14 {dimension_numbers = #tpu.dot_dimension_numbers<[1], [0], [0], [1], [0, 0, 1, 1], [], []>} : vector<8x128xf32>, vector<128x128xf32>, vector<8x128xf32> -> vector<8x128xf32>
    %18 = vector.broadcast %2 : vector<8x1xf32> to vector<8x128xf32>
    %19 = arith.addf %17, %18 : vector<8x128xf32>
    %c0_15 = arith.constant 0 : index
    %c0_16 = arith.constant 0 : index
    %20 = vector.load %arg6[%c0_15, %c0_16] : memref<8x128xf32, #tpu.memory_space<vmem>>, vector<8x128xf32>
    tpu.vector_store %arg6[%c0_15, %c0_16], %19 {strides = array<i32>} : memref<8x128xf32, #tpu.memory_space<vmem>>, vector<8x128xf32>,
    return
  }
  func.func @transform_0(%arg0: i32) -> (i32, i32) {
    %c0_i32 = arith.constant 0 : i32
    %c0_i32_0 = arith.constant 0 : i32
    return %c0_i32, %arg0 : i32, i32
  }
  func.func @transform_1(%arg0: i32) -> (i32, i32) {
    %c0_i32 = arith.constant 0 : i32
    %c0_i32_0 = arith.constant 0 : i32
    %c0_i32_1 = arith.constant 0 : i32
    return %c0_i32, %c0_i32_0 : i32, i32
  }
  func.func @transform_2(%arg0: i32) -> (i32, i32) {
    %c0_i32 = arith.constant 0 : i32
    %c0_i32_0 = arith.constant 0 : i32
    %c0_i32_1 = arith.constant 0 : i32
    return %c0_i32, %c0_i32_0 : i32, i32
  }
  func.func @transform_3(%arg0: i32) -> (i32, i32) {
    %c0_i32 = arith.constant 0 : i32
    %c0_i32_0 = arith.constant 0 : i32
    %c0_i32_1 = arith.constant 0 : i32
    return %c0_i32, %c0_i32_0 : i32, i32
  }
  func.func @transform_4(%arg0: i32) -> (i32, i32) {
    %c0_i32 = arith.constant 0 : i32
    %c0_i32_0 = arith.constant 0 : i32
    %c0_i32_1 = arith.constant 0 : i32
    return %c0_i32, %c0_i32_0 : i32, i32
  }
  func.func @transform_5(%arg0: i32) -> (i32, i32) {
    %c0_i32 = arith.constant 0 : i32
    %c0_i32_0 = arith.constant 0 : i32
    return %c0_i32, %arg0 : i32, i32
  }
}

</mosaic_0001>

<llo_original>
// kernel: mlp_forward.1
$region0: #{mlp_forward.1}
  #allocation0 [shape = 'u32[]', space=smem, size = 0x4, offset = 0x4, fixed_abs, tag = 'smem constant byte address 0x4 - core index']
  #allocation1 [shape = 'u32[144,128]{1,0:T(1,128)}', space=vmem, size = 0x12000, scoped, tag = 'internal scratch']
  %s0 = inlined_call_operand.vmem [shape: f32[16,128], index: 0, kind: input, shape index: {}]
  %s1 = inlined_call_operand.hbm [shape: f32[128,16], index: 1, kind: input, shape index: {}]
  %s2 = inlined_call_operand.hbm [shape: f32[128,128], index: 2, kind: input, shape index: {}]
  %s3 = inlined_call_operand.vmem [shape: f32[8,128], index: 3, kind: input, shape index: {}]
  %s4 = inlined_call_operand.hbm [shape: f32[128,3], index: 4, kind: input, shape index: {}]
  %s5 = inlined_call_operand.vmem [shape: f32[8,128], index: 5, kind: output, shape index: {}]
  %s6 = sld [smem:[#allocation0]]
  $region42: #{mlp_forward.1} parent=0
    _
  %s8 = ssub.s32 1, %s6
  %s9 = scalar_select 0, %s8, %s6
  $region1: #{mlp_forward.1} parent=0
    #allocation2 [shape = 'u8[65536]{0}', space=vmem, size = 0x10000, scoped, tag = 'input window, operand 1, single buffered']
    #allocation3 [shape = 's32[1]{0}', space=sflag, size = 0x4, scoped, tag = 'scoped memory for mlp_forward.1']
    #allocation4 [shape = 'u8[65536]{0}', space=vmem, size = 0x10000, scoped, tag = 'input window, operand 2, single buffered']
    #allocation5 [shape = 's32[1]{0}', space=sflag, size = 0x4, scoped, tag = 'scoped memory for mlp_forward.1']
    #allocation6 [shape = 'u8[65536]{0}', space=vmem, size = 0x10000, scoped, tag = 'input window, operand 4, single buffered']
    %10 = vsyncpa [#allocation3], 0
    %11 = vsyncpa [#allocation5], 0
    // Predicated region
    $region2: #{mlp_forward.1} parent=1 // pred_check
      _
    $region3: #{mlp_forward.1} parent=1 // pred_check_branch
      %13 = sbr.rel (0) target = $region5
    $region4: #{mlp_forward.1} parent=1 // pred_region
      _
    $region5: #{mlp_forward.1} parent=1 // pred_fallthru
      _
    // Predicated region
    $region6: #{mlp_forward.1} parent=1 // pred_check
      _
    $region7: #{mlp_forward.1} parent=1 // pred_check_branch
      %15 = sbr.rel (0) target = $region9
    $region8: #{mlp_forward.1} parent=1 // pred_region
      %s17 = ssub.s32 2048, 2048
      %18 = vsyncadd [#allocation3], %s17
      %s19 = sshll.u32 [#allocation2], 4
      %s20 = int_to_ptr.vmem [resolvable:$true] %s19
      %25 = dma.hbm_to_vmem [thread:$0]  %s1, 2048, %s20, [#allocation3], 128, 128, 8
    $region9: #{mlp_forward.1} parent=1 // pred_fallthru
      _
    // Predicated region
    $region10: #{mlp_forward.1} parent=1 // pred_check
      _
    $region11: #{mlp_forward.1} parent=1 // pred_check_branch
      %27 = sbr.rel (0) target = $region13
    $region12: #{mlp_forward.1} parent=1 // pred_region
      %s29 = ssub.s32 2048, 2048
      %30 = vsyncadd [#allocation5], %s29
      %s31 = sshll.u32 [#allocation4], 4
      %s32 = int_to_ptr.vmem [resolvable:$true] %s31
      %37 = dma.hbm_to_vmem [thread:$0]  %s2, 2048, %s32, [#allocation5], 128, 128, 8
    $region13: #{mlp_forward.1} parent=1 // pred_fallthru
      _
    // Predicated region
    $region14: #{mlp_forward.1} parent=1 // pred_check
      _
    $region15: #{mlp_forward.1} parent=1 // pred_check_branch
      %39 = sbr.rel (0) target = $region17
    $region16: #{mlp_forward.1} parent=1 // pred_region
      _
    $region17: #{mlp_forward.1} parent=1 // pred_fallthru
      _
    // Predicated region
    $region18: #{mlp_forward.1} parent=1 // pred_check
      _
    $region19: #{mlp_forward.1} parent=1 // pred_check_branch
      %41 = sbr.rel (0) target = $region21
    $region20: #{mlp_forward.1} parent=1 // pred_region
      %s43 = ssub.s32 2048, 2048
      %44 = vsyncadd [#allocation5], %s43
      %s45 = sshll.u32 [#allocation6], 4
      %s46 = int_to_ptr.vmem [resolvable:$true] %s45
      %51 = dma.hbm_to_vmem [thread:$0]  %s4, 2048, %s46, [#allocation5], 128, 128, 8
    $region21: #{mlp_forward.1} parent=1 // pred_fallthru
      _
    // Predicated region
    $region22: #{mlp_forward.1} parent=1 // pred_check
      _
    $region23: #{mlp_forward.1} parent=1 // pred_check_branch
      %53 = sbr.rel (0) target = $region25
    $region24: #{mlp_forward.1} parent=1 // pred_region
      %54 = dma.done [#allocation3], 2048
    $region25: #{mlp_forward.1} parent=1 // pred_fallthru
      _
    // Predicated region
    $region26: #{mlp_forward.1} parent=1 // pred_check
      _
    $region27: #{mlp_forward.1} parent=1 // pred_check_branch
      %56 = sbr.rel (0) target = $region29
    $region28: #{mlp_forward.1} parent=1 // pred_region
      %57 = dma.done [#allocation5], 2048
    $region29: #{mlp_forward.1} parent=1 // pred_fallthru
      _
    // Predicated region
    $region30: #{mlp_forward.1} parent=1 // pred_check
      _
    $region31: #{mlp_forward.1} parent=1 // pred_check_branch
      %59 = sbr.rel (0) target = $region33
    $region32: #{mlp_forward.1} parent=1 // pred_region
      %60 = dma.done [#allocation5], 2048
    $region33: #{mlp_forward.1} parent=1 // pred_fallthru
      _
    %v61 = vld [vmem:[#allocation6] sm:$0xff]
    %v62 = vld [vmem:[#allocation6 + $0x8] sm:$0xff]
    %v63 = vld [vmem:[#allocation6 + $0x10] sm:$0xff]
    %v64 = vld [vmem:[#allocation6 + $0x18] sm:$0xff]
    %v65 = vld [vmem:[#allocation6 + $0x20] sm:$0xff]
    %v66 = vld [vmem:[#allocation6 + $0x28] sm:$0xff]
    %v67 = vld [vmem:[#allocation6 + $0x30] sm:$0xff]
    %v68 = vld [vmem:[#allocation6 + $0x38] sm:$0xff]
    %v69 = vld [vmem:[#allocation6 + $0x40] sm:$0xff]
    %v70 = vld [vmem:[#allocation6 + $0x48] sm:$0xff]
    %v71 = vld [vmem:[#allocation6 + $0x50] sm:$0xff]
    %v72 = vld [vmem:[#allocation6 + $0x58] sm:$0xff]
    %v73 = vld [vmem:[#allocation6 + $0x60] sm:$0xff]
    %v74 = vld [vmem:[#allocation6 + $0x68] sm:$0xff]
    %v75 = vld [vmem:[#allocation6 + $0x70] sm:$0xff]
    %v76 = vld [vmem:[#allocation6 + $0x78] sm:$0xff]
    %v77 = vld [vmem:[#allocation2] sm:$0xff]
    %v78 = vld [vmem:[#allocation2 + $0x8] sm:$0xff]
    %v79 = vld [vmem:[#allocation2 + $0x10] sm:$0xff]
    %v80 = vld [vmem:[#allocation2 + $0x18] sm:$0xff]
    %v81 = vld [vmem:[#allocation2 + $0x20] sm:$0xff]
    %v82 = vld [vmem:[#allocation2 + $0x28] sm:$0xff]
    %v83 = vld [vmem:[#allocation2 + $0x30] sm:$0xff]
    %v84 = vld [vmem:[#allocation2 + $0x38] sm:$0xff]
    %v85 = vld [vmem:[#allocation2 + $0x40] sm:$0xff]
    %v86 = vld [vmem:[#allocation2 + $0x48] sm:$0xff]
    %v87 = vld [vmem:[#allocation2 + $0x50] sm:$0xff]
    %v88 = vld [vmem:[#allocation2 + $0x58] sm:$0xff]
    %v89 = vld [vmem:[#allocation2 + $0x60] sm:$0xff]
    %v90 = vld [vmem:[#allocation2 + $0x68] sm:$0xff]
    %v91 = vld [vmem:[#allocation2 + $0x70] sm:$0xff]
    %v92 = vld [vmem:[#allocation2 + $0x78] sm:$0xff]
    %v93 = vld [vmem:[%s0] sm:$0xff]
    %v94 = vld [vmem:[%s0 + $0x8] sm:$0xff]
    %96 = vset.pattern.permute.xlu0 0
    %97 = vperm.xlu0 %96, %v61
    %v98 = vpop.permute.xlu0 %97
    %101 = vset.pattern.permute.xlu0 0
    %102 = vperm.xlu0 %101, %v62
    %v103 = vpop.permute.xlu0 %102
    %106 = vset.pattern.permute.xlu0 0
    %107 = vperm.xlu0 %106, %v63
    %v108 = vpop.permute.xlu0 %107
    %111 = vset.pattern.permute.xlu0 0
    %112 = vperm.xlu0 %111, %v64
    %v113 = vpop.permute.xlu0 %112
    %116 = vset.pattern.permute.xlu0 0
    %117 = vperm.xlu0 %116, %v65
    %v118 = vpop.permute.xlu0 %117
    %121 = vset.pattern.permute.xlu0 0
    %122 = vperm.xlu0 %121, %v66
    %v123 = vpop.permute.xlu0 %122
    %126 = vset.pattern.permute.xlu0 0
    %127 = vperm.xlu0 %126, %v67
    %v128 = vpop.permute.xlu0 %127
    %131 = vset.pattern.permute.xlu0 0
    %132 = vperm.xlu0 %131, %v68
    %v133 = vpop.permute.xlu0 %132
    %136 = vset.pattern.permute.xlu0 0
    %137 = vperm.xlu0 %136, %v69
    %v138 = vpop.permute.xlu0 %137
    %141 = vset.pattern.permute.xlu0 0
    %142 = vperm.xlu0 %141, %v70
    %v143 = vpop.permute.xlu0 %142
    %146 = vset.pattern.permute.xlu0 0
    %147 = vperm.xlu0 %146, %v71
    %v148 = vpop.permute.xlu0 %147
    %151 = vset.pattern.permute.xlu0 0
    %152 = vperm.xlu0 %151, %v72
    %v153 = vpop.permute.xlu0 %152
    %156 = vset.pattern.permute.xlu0 0
    %157 = vperm.xlu0 %156, %v73
    %v158 = vpop.permute.xlu0 %157
    %161 = vset.pattern.permute.xlu0 0
    %162 = vperm.xlu0 %161, %v74
    %v163 = vpop.permute.xlu0 %162
    %166 = vset.pattern.permute.xlu0 0
    %167 = vperm.xlu0 %166, %v75
    %v168 = vpop.permute.xlu0 %167
    %171 = vset.pattern.permute.xlu0 0
    %172 = vperm.xlu0 %171, %v76
    %v173 = vpop.permute.xlu0 %172
    %vm175 = vcmask 130048
    %v177 = vsel %vm175, %v77, 0
    %v180 = vsel %vm175, %v78, 0
    %v183 = vsel %vm175, %v79, 0
    %v186 = vsel %vm175, %v80, 0
    %v189 = vsel %vm175, %v81, 0
    %v192 = vsel %vm175, %v82, 0
    %v195 = vsel %vm175, %v83, 0
    %v198 = vsel %vm175, %v84, 0
    %v201 = vsel %vm175, %v85, 0
    %v204 = vsel %vm175, %v86, 0
    %v207 = vsel %vm175, %v87, 0
    %v210 = vsel %vm175, %v88, 0
    %v213 = vsel %vm175, %v89, 0
    %v216 = vsel %vm175, %v90, 0
    %v219 = vsel %vm175, %v91, 0
    %v222 = vsel %vm175, %v92, 0
    %224 = vmatprep.subr.mxu0 0.0
    %225 = vmatpush1.msra.mxu0 %v93
    %226 = vmatprep.subr.mxu0 0.0
    %227 = vmatpush1.msra.mxu0 %v94
    %228 = vmatprep.subr.mxu0 0.0
    %229 = vmatpush1.msra.mxu0 0.0
    %230 = vmatprep.subr.mxu0 0.0
    %231 = vmatpush1.msra.mxu0 0.0
    %232 = vmatprep.subr.mxu0 0.0
    %233 = vmatpush1.msra.mxu0 0.0
    %234 = vmatprep.subr.mxu0 0.0
    %235 = vmatpush1.msra.mxu0 0.0
    %236 = vmatprep.subr.mxu0 0.0
    %237 = vmatpush1.msra.mxu0 0.0
    %238 = vmatprep.subr.mxu0 0.0
    %239 = vmatpush1.msra.mxu0 0.0
    %240 = vmatprep.subr.mxu0 0.0
    %241 = vmatpush1.msra.mxu0 0.0
    %242 = vmatprep.subr.mxu0 0.0
    %243 = vmatpush1.msra.mxu0 0.0
    %244 = vmatprep.subr.mxu0 0.0
    %245 = vmatpush1.msra.mxu0 0.0
    %246 = vmatprep.subr.mxu0 0.0
    %247 = vmatpush1.msra.mxu0 0.0
    %248 = vmatprep.subr.mxu0 0.0
    %249 = vmatpush1.msra.mxu0 0.0
    %250 = vmatprep.subr.mxu0 0.0
    %251 = vmatpush1.msra.mxu0 0.0
    %252 = vmatprep.subr.mxu0 0.0
    %253 = vmatpush1.msra.mxu0 0.0
    %254 = vmatprep.subr.mxu0 0.0
    %255 = vmatpush1.msra.mxu0 0.0
    %256 = vmatprep.subr.mxu0 0.0
    %257 = vmatpush1.msra.mxu0 0.0
    %258 = vmatprep.subr.mxu0 0.0
    %259 = vmatpush1.msra.mxu0 0.0
    %260 = vmatprep.subr.mxu0 0.0
    %261 = vmatpush1.msra.mxu0 0.0
    %262 = vmatprep.subr.mxu0 0.0
    %263 = vmatpush1.msra.mxu0 0.0
    %264 = vmatprep.subr.mxu0 0.0
    %265 = vmatpush1.msra.mxu0 0.0
    %266 = vmatprep.subr.mxu0 0.0
    %267 = vmatpush1.msra.mxu0 0.0
    %268 = vmatprep.subr.mxu0 0.0
    %269 = vmatpush1.msra.mxu0 0.0
    %270 = vmatprep.subr.mxu0 0.0
    %271 = vmatpush1.msra.mxu0 0.0
    %272 = vmatprep.subr.mxu0 0.0
    %273 = vmatpush1.msra.mxu0 0.0
    %274 = vmatprep.subr.mxu0 0.0
    %275 = vmatpush1.msra.mxu0 0.0
    %276 = vmatprep.subr.mxu0 0.0
    %277 = vmatpush1.msra.mxu0 0.0
    %278 = vmatprep.subr.mxu0 0.0
    %279 = vmatpush1.msra.mxu0 0.0
    %280 = vmatprep.subr.mxu0 0.0
    %281 = vmatpush1.msra.mxu0 0.0
    %282 = vmatprep.subr.mxu0 0.0
    %283 = vmatpush1.msra.mxu0 0.0
    %284 = vmatprep.subr.mxu0 0.0
    %285 = vmatpush1.msra.mxu0 0.0
    %286 = vmatprep.subr.mxu0 0.0
    %287 = vmatpush1.msra.mxu0 0.0
    %288 = vmatprep.mubr.f32.mxu0 0.0
    %289 = vmatmul.mubr.f32.gmra.mrb[0].mxu0 %v177
    %v290 = vpop.f32.mrb[0].mxu0
    %v291 = vadd.f32 %v98, %v290
    %v292 = vpop.f32.mrb[0].mxu0
    %293 = vmatprep.mubr.f32.mxu0 0.0
    %294 = vmatmul.mubr.f32.gmra.mrb[0].mxu0 %v180
    %v295 = vpop.f32.mrb[0].mxu0
    %v296 = vadd.f32 %v103, %v295
    %v297 = vpop.f32.mrb[0].mxu0
    %298 = vmatprep.mubr.f32.mxu0 0.0
    %299 = vmatmul.mubr.f32.gmra.mrb[0].mxu0 %v183
    %v300 = vpop.f32.mrb[0].mxu0
    %v301 = vadd.f32 %v108, %v300
    %v302 = vpop.f32.mrb[0].mxu0
    %303 = vmatprep.mubr.f32.mxu0 0.0
    %304 = vmatmul.mubr.f32.gmra.mrb[0].mxu0 %v186
    %v305 = vpop.f32.mrb[0].mxu0
    %v306 = vadd.f32 %v113, %v305
    %v307 = vpop.f32.mrb[0].mxu0
    %308 = vmatprep.mubr.f32.mxu0 0.0
    %309 = vmatmul.mubr.f32.gmra.mrb[0].mxu0 %v189
    %v310 = vpop.f32.mrb[0].mxu0
    %v311 = vadd.f32 %v118, %v310
    %v312 = vpop.f32.mrb[0].mxu0
    %313 = vmatprep.mubr.f32.mxu0 0.0
    %314 = vmatmul.mubr.f32.gmra.mrb[0].mxu0 %v192
    %v315 = vpop.f32.mrb[0].mxu0
    %v316 = vadd.f32 %v123, %v315
    %v317 = vpop.f32.mrb[0].mxu0
    %318 = vmatprep.mubr.f32.mxu0 0.0
    %319 = vmatmul.mubr.f32.gmra.mrb[0].mxu0 %v195
    %v320 = vpop.f32.mrb[0].mxu0
    %v321 = vadd.f32 %v128, %v320
    %v322 = vpop.f32.mrb[0].mxu0
    %323 = vmatprep.mubr.f32.mxu0 0.0
    %324 = vmatmul.mubr.f32.gmra.mrb[0].mxu0 %v198
    %v325 = vpop.f32.mrb[0].mxu0
    %v326 = vadd.f32 %v133, %v325
    %v327 = vpop.f32.mrb[0].mxu0
    %328 = vmatprep.mubr.f32.mxu0 0.0
    %329 = vmatmul.mubr.f32.gmra.mrb[0].mxu0 %v201
    %v330 = vpop.f32.mrb[0].mxu0
    %v331 = vadd.f32 %v138, %v330
    %v332 = vpop.f32.mrb[0].mxu0
    %333 = vmatprep.mubr.f32.mxu0 0.0
    %334 = vmatmul.mubr.f32.gmra.mrb[0].mxu0 %v204
    %v335 = vpop.f32.mrb[0].mxu0
    %v336 = vadd.f32 %v143, %v335
    %v337 = vpop.f32.mrb[0].mxu0
    %338 = vmatprep.mubr.f32.mxu0 0.0
    %339 = vmatmul.mubr.f32.gmra.mrb[0].mxu0 %v207
    %v340 = vpop.f32.mrb[0].mxu0
    %v341 = vadd.f32 %v148, %v340
    %v342 = vpop.f32.mrb[0].mxu0
    %343 = vmatprep.mubr.f32.mxu0 0.0
    %344 = vmatmul.mubr.f32.gmra.mrb[0].mxu0 %v210
    %v345 = vpop.f32.mrb[0].mxu0
    %v346 = vadd.f32 %v153, %v345
    %v347 = vpop.f32.mrb[0].mxu0
    %348 = vmatprep.mubr.f32.mxu0 0.0
    %349 = vmatmul.mubr.f32.gmra.mrb[0].mxu0 %v213
    %v350 = vpop.f32.mrb[0].mxu0
    %v351 = vadd.f32 %v158, %v350
    %v352 = vpop.f32.mrb[0].mxu0
    %353 = vmatprep.mubr.f32.mxu0 0.0
    %354 = vmatmul.mubr.f32.gmra.mrb[0].mxu0 %v216
    %v355 = vpop.f32.mrb[0].mxu0
    %v356 = vadd.f32 %v163, %v355
    %v357 = vpop.f32.mrb[0].mxu0
    %358 = vmatprep.mubr.f32.mxu0 0.0
    %359 = vmatmul.mubr.f32.gmra.mrb[0].mxu0 %v219
    %v360 = vpop.f32.mrb[0].mxu0
    %v361 = vadd.f32 %v168, %v360
    %v362 = vpop.f32.mrb[0].mxu0
    %363 = vmatprep.mubr.f32.mxu0 0.0
    %364 = vmatmul.mubr.f32.gmra.mrb[0].mxu0 %v222
    %v365 = vpop.f32.mrb[0].mxu0
    %v366 = vadd.f32 %v173, %v365
    %v367 = vpop.f32.mrb[0].mxu0
    %368 = vdwg.mxu0
    %v369 = vmax.f32 %v291, 0.0
    %v370 = vmax.f32 %v296, 0.0
    %v371 = vmax.f32 %v301, 0.0
    %v372 = vmax.f32 %v306, 0.0
    %v373 = vmax.f32 %v311, 0.0
    %v374 = vmax.f32 %v316, 0.0
    %v375 = vmax.f32 %v321, 0.0
    %v376 = vmax.f32 %v326, 0.0
    %v377 = vmax.f32 %v331, 0.0
    %v378 = vmax.f32 %v336, 0.0
    %v379 = vmax.f32 %v341, 0.0
    %v380 = vmax.f32 %v346, 0.0
    %v381 = vmax.f32 %v351, 0.0
    %v382 = vmax.f32 %v356, 0.0
    %v383 = vmax.f32 %v361, 0.0
    %v384 = vmax.f32 %v366, 0.0
    %v385 = vld [vmem:[#allocation4] sm:$0xff]
    %v386 = vld [vmem:[#allocation4 + $0x8] sm:$0xff]
    %v387 = vld [vmem:[#allocation4 + $0x10] sm:$0xff]
    %v388 = vld [vmem:[#allocation4 + $0x18] sm:$0xff]
    %v389 = vld [vmem:[#allocation4 + $0x20] sm:$0xff]
    %v390 = vld [vmem:[#allocation4 + $0x28] sm:$0xff]
    %v391 = vld [vmem:[#allocation4 + $0x30] sm:$0xff]
    %v392 = vld [vmem:[#allocation4 + $0x38] sm:$0xff]
    %v393 = vld [vmem:[#allocation4 + $0x40] sm:$0xff]
    %v394 = vld [vmem:[#allocation4 + $0x48] sm:$0xff]
    %v395 = vld [vmem:[#allocation4 + $0x50] sm:$0xff]
    %v396 = vld [vmem:[#allocation4 + $0x58] sm:$0xff]
    %v397 = vld [vmem:[#allocation4 + $0x60] sm:$0xff]
    %v398 = vld [vmem:[#allocation4 + $0x68] sm:$0xff]
    %v399 = vld [vmem:[#allocation4 + $0x70] sm:$0xff]
    %v400 = vld [vmem:[#allocation4 + $0x78] sm:$0xff]
    %401 = vset.pattern.permute.xlu0 1
    %402 = vperm.xlu0 %401, %v61
    %v403 = vpop.permute.xlu0 %402
    %405 = vset.pattern.permute.xlu0 1
    %406 = vperm.xlu0 %405, %v62
    %v407 = vpop.permute.xlu0 %406
    %409 = vset.pattern.permute.xlu0 1
    %410 = vperm.xlu0 %409, %v63
    %v411 = vpop.permute.xlu0 %410
    %413 = vset.pattern.permute.xlu0 1
    %414 = vperm.xlu0 %413, %v64
    %v415 = vpop.permute.xlu0 %414
    %417 = vset.pattern.permute.xlu0 1
    %418 = vperm.xlu0 %417, %v65
    %v419 = vpop.permute.xlu0 %418
    %421 = vset.pattern.permute.xlu0 1
    %422 = vperm.xlu0 %421, %v66
    %v423 = vpop.permute.xlu0 %422
    %425 = vset.pattern.permute.xlu0 1
    %426 = vperm.xlu0 %425, %v67
    %v427 = vpop.permute.xlu0 %426
    %429 = vset.pattern.permute.xlu0 1
    %430 = vperm.xlu0 %429, %v68
    %v431 = vpop.permute.xlu0 %430
    %433 = vset.pattern.permute.xlu0 1
    %434 = vperm.xlu0 %433, %v69
    %v435 = vpop.permute.xlu0 %434
    %437 = vset.pattern.permute.xlu0 1
    %438 = vperm.xlu0 %437, %v70
    %v439 = vpop.permute.xlu0 %438
    %441 = vset.pattern.permute.xlu0 1
    %442 = vperm.xlu0 %441, %v71
    %v443 = vpop.permute.xlu0 %442
    %445 = vset.pattern.permute.xlu0 1
    %446 = vperm.xlu0 %445, %v72
    %v447 = vpop.permute.xlu0 %446
    %449 = vset.pattern.permute.xlu0 1
    %450 = vperm.xlu0 %449, %v73
    %v451 = vpop.permute.xlu0 %450
    %453 = vset.pattern.permute.xlu0 1
    %454 = vperm.xlu0 %453, %v74
    %v455 = vpop.permute.xlu0 %454
    %457 = vset.pattern.permute.xlu0 1
    %458 = vperm.xlu0 %457, %v75
    %v459 = vpop.permute.xlu0 %458
    %461 = vset.pattern.permute.xlu0 1
    %462 = vperm.xlu0 %461, %v76
    %v463 = vpop.permute.xlu0 %462
    %465 = vmatprep.subr.mxu0 0.0
    %466 = vmatpush1.msra.mxu0 %v369
    %467 = vmatprep.subr.mxu0 0.0
    %468 = vmatpush1.msra.mxu0 %v370
    %469 = vmatprep.subr.mxu0 0.0
    %470 = vmatpush1.msra.mxu0 %v371
    %471 = vmatprep.subr.mxu0 0.0
    %472 = vmatpush1.msra.mxu0 %v372
    %473 = vmatprep.subr.mxu0 0.0
    %474 = vmatpush1.msra.mxu0 %v373
    %475 = vmatprep.subr.mxu0 0.0
    %476 = vmatpush1.msra.mxu0 %v374
    %477 = vmatprep.subr.mxu0 0.0
    %478 = vmatpush1.msra.mxu0 %v375
    %479 = vmatprep.subr.mxu0 0.0
    %480 = vmatpush1.msra.mxu0 %v376
    %481 = vmatprep.subr.mxu0 0.0
    %482 = vmatpush1.msra.mxu0 %v377
    %483 = vmatprep.subr.mxu0 0.0
    %484 = vmatpush1.msra.mxu0 %v378
    %485 = vmatprep.subr.mxu0 0.0
    %486 = vmatpush1.msra.mxu0 %v379
    %487 = vmatprep.subr.mxu0 0.0
    %488 = vmatpush1.msra.mxu0 %v380
    %489 = vmatprep.subr.mxu0 0.0
    %490 = vmatpush1.msra.mxu0 %v381
    %491 = vmatprep.subr.mxu0 0.0
    %492 = vmatpush1.msra.mxu0 %v382
    %493 = vmatprep.subr.mxu0 0.0
    %494 = vmatpush1.msra.mxu0 %v383
    %495 = vmatprep.subr.mxu0 0.0
    %496 = vmatpush1.msra.mxu0 %v384
    %497 = vmatprep.subr.mxu0 0.0
    %498 = vmatpush1.msra.mxu0 0.0
    %499 = vmatprep.subr.mxu0 0.0
    %500 = vmatpush1.msra.mxu0 0.0
    %501 = vmatprep.subr.mxu0 0.0
    %502 = vmatpush1.msra.mxu0 0.0
    %503 = vmatprep.subr.mxu0 0.0
    %504 = vmatpush1.msra.mxu0 0.0
    %505 = vmatprep.subr.mxu0 0.0
    %506 = vmatpush1.msra.mxu0 0.0
    %507 = vmatprep.subr.mxu0 0.0
    %508 = vmatpush1.msra.mxu0 0.0
    %509 = vmatprep.subr.mxu0 0.0
    %510 = vmatpush1.msra.mxu0 0.0
    %511 = vmatprep.subr.mxu0 0.0
    %512 = vmatpush1.msra.mxu0 0.0
    %513 = vmatprep.subr.mxu0 0.0
    %514 = vmatpush1.msra.mxu0 0.0
    %515 = vmatprep.subr.mxu0 0.0
    %516 = vmatpush1.msra.mxu0 0.0
    %517 = vmatprep.subr.mxu0 0.0
    %518 = vmatpush1.msra.mxu0 0.0
    %519 = vmatprep.subr.mxu0 0.0
    %520 = vmatpush1.msra.mxu0 0.0
    %521 = vmatprep.subr.mxu0 0.0
    %522 = vmatpush1.msra.mxu0 0.0
    %523 = vmatprep.subr.mxu0 0.0
    %524 = vmatpush1.msra.mxu0 0.0
    %525 = vmatprep.subr.mxu0 0.0
    %526 = vmatpush1.msra.mxu0 0.0
    %527 = vmatprep.subr.mxu0 0.0
    %528 = vmatpush1.msra.mxu0 0.0
    %529 = vmatprep.mubr.f32.mxu0 0.0
    %530 = vmatmul.mubr.f32.gmra.mrb[0].mxu0 %v385
    %v531 = vpop.f32.mrb[0].mxu0
    %v532 = vadd.f32 %v403, %v531
    %v533 = vpop.f32.mrb[0].mxu0
    %534 = vmatprep.mubr.f32.mxu0 0.0
    %535 = vmatmul.mubr.f32.gmra.mrb[0].mxu0 %v386
    %v536 = vpop.f32.mrb[0].mxu0
    %v537 = vadd.f32 %v407, %v536
    %v538 = vpop.f32.mrb[0].mxu0
    %539 = vmatprep.mubr.f32.mxu0 0.0
    %540 = vmatmul.mubr.f32.gmra.mrb[0].mxu0 %v387
    %v541 = vpop.f32.mrb[0].mxu0
    %v542 = vadd.f32 %v411, %v541
    %v543 = vpop.f32.mrb[0].mxu0
    %544 = vmatprep.mubr.f32.mxu0 0.0
    %545 = vmatmul.mubr.f32.gmra.mrb[0].mxu0 %v388
    %v546 = vpop.f32.mrb[0].mxu0
    %v547 = vadd.f32 %v415, %v546
    %v548 = vpop.f32.mrb[0].mxu0
    %549 = vmatprep.mubr.f32.mxu0 0.0
    %550 = vmatmul.mubr.f32.gmra.mrb[0].mxu0 %v389
    %v551 = vpop.f32.mrb[0].mxu0
    %v552 = vadd.f32 %v419, %v551
    %v553 = vpop.f32.mrb[0].mxu0
    %554 = vmatprep.mubr.f32.mxu0 0.0
    %555 = vmatmul.mubr.f32.gmra.mrb[0].mxu0 %v390
    %v556 = vpop.f32.mrb[0].mxu0
    %v557 = vadd.f32 %v423, %v556
    %v558 = vpop.f32.mrb[0].mxu0
    %559 = vmatprep.mubr.f32.mxu0 0.0
    %560 = vmatmul.mubr.f32.gmra.mrb[0].mxu0 %v391
    %v561 = vpop.f32.mrb[0].mxu0
    %v562 = vadd.f32 %v427, %v561
    %v563 = vpop.f32.mrb[0].mxu0
    %564 = vmatprep.mubr.f32.mxu0 0.0
    %565 = vmatmul.mubr.f32.gmra.mrb[0].mxu0 %v392
    %v566 = vpop.f32.mrb[0].mxu0
    %v567 = vadd.f32 %v431, %v566
    %v568 = vpop.f32.mrb[0].mxu0
    %569 = vmatprep.mubr.f32.mxu0 0.0
    %570 = vmatmul.mubr.f32.gmra.mrb[0].mxu0 %v393
    %v571 = vpop.f32.mrb[0].mxu0
    %v572 = vadd.f32 %v435, %v571
    %v573 = vpop.f32.mrb[0].mxu0
    %574 = vmatprep.mubr.f32.mxu0 0.0
    %575 = vmatmul.mubr.f32.gmra.mrb[0].mxu0 %v394
    %v576 = vpop.f32.mrb[0].mxu0
    %v577 = vadd.f32 %v439, %v576
    %v578 = vpop.f32.mrb[0].mxu0
    %579 = vmatprep.mubr.f32.mxu0 0.0
    %580 = vmatmul.mubr.f32.gmra.mrb[0].mxu0 %v395
    %v581 = vpop.f32.mrb[0].mxu0
    %v582 = vadd.f32 %v443, %v581
    %v583 = vpop.f32.mrb[0].mxu0
    %584 = vmatprep.mubr.f32.mxu0 0.0
    %585 = vmatmul.mubr.f32.gmra.mrb[0].mxu0 %v396
    %v586 = vpop.f32.mrb[0].mxu0
    %v587 = vadd.f32 %v447, %v586
    %v588 = vpop.f32.mrb[0].mxu0
    %589 = vmatprep.mubr.f32.mxu0 0.0
    %590 = vmatmul.mubr.f32.gmra.mrb[0].mxu0 %v397
    %v591 = vpop.f32.mrb[0].mxu0
    %v592 = vadd.f32 %v451, %v591
    %v593 = vpop.f32.mrb[0].mxu0
    %594 = vmatprep.mubr.f32.mxu0 0.0
    %595 = vmatmul.mubr.f32.gmra.mrb[0].mxu0 %v398
    %v596 = vpop.f32.mrb[0].mxu0
    %v597 = vadd.f32 %v455, %v596
    %v598 = vpop.f32.mrb[0].mxu0
    %599 = vmatprep.mubr.f32.mxu0 0.0
    %600 = vmatmul.mubr.f32.gmra.mrb[0].mxu0 %v399
    %v601 = vpop.f32.mrb[0].mxu0
    %v602 = vadd.f32 %v459, %v601
    %v603 = vpop.f32.mrb[0].mxu0
    %604 = vmatprep.mubr.f32.mxu0 0.0
    %605 = vmatmul.mubr.f32.gmra.mrb[0].mxu0 %v400
    %v606 = vpop.f32.mrb[0].mxu0
    %v607 = vadd.f32 %v463, %v606
    %v608 = vpop.f32.mrb[0].mxu0
    %609 = vdwg.mxu0
    %v610 = vmax.f32 %v532, 0.0
    %v611 = vmax.f32 %v537, 0.0
    %v612 = vmax.f32 %v542, 0.0
    %v613 = vmax.f32 %v547, 0.0
    %v614 = vmax.f32 %v552, 0.0
    %v615 = vmax.f32 %v557, 0.0
    %v616 = vmax.f32 %v562, 0.0
    %v617 = vmax.f32 %v567, 0.0
    %v618 = vmax.f32 %v572, 0.0
    %v619 = vmax.f32 %v577, 0.0
    %v620 = vmax.f32 %v582, 0.0
    %v621 = vmax.f32 %v587, 0.0
    %v622 = vmax.f32 %v592, 0.0
    %v623 = vmax.f32 %v597, 0.0
    %v624 = vmax.f32 %v602, 0.0
    %v625 = vmax.f32 %v607, 0.0
    %v626 = vld [vmem:[%s3] sm:$0xff]
    %627 = vset.pattern.permute.xlu0 2
    %628 = vperm.xlu0 %627, %v61
    %v629 = vpop.permute.xlu0 %628
    %631 = vmatprep.subr.mxu0 0.0
    %632 = vmatpush1.msra.mxu0 %v610
    %633 = vmatprep.subr.mxu0 0.0
    %634 = vmatpush1.msra.mxu0 %v611
    %635 = vmatprep.subr.mxu0 0.0
    %636 = vmatpush1.msra.mxu0 %v612
    %637 = vmatprep.subr.mxu0 0.0
    %638 = vmatpush1.msra.mxu0 %v613
    %639 = vmatprep.subr.mxu0 0.0
    %640 = vmatpush1.msra.mxu0 %v614
    %641 = vmatprep.subr.mxu0 0.0
    %642 = vmatpush1.msra.mxu0 %v615
    %643 = vmatprep.subr.mxu0 0.0
    %644 = vmatpush1.msra.mxu0 %v616
    %645 = vmatprep.subr.mxu0 0.0
    %646 = vmatpush1.msra.mxu0 %v617
    %647 = vmatprep.subr.mxu0 0.0
    %648 = vmatpush1.msra.mxu0 %v618
    %649 = vmatprep.subr.mxu0 0.0
    %650 = vmatpush1.msra.mxu0 %v619
    %651 = vmatprep.subr.mxu0 0.0
    %652 = vmatpush1.msra.mxu0 %v620
    %653 = vmatprep.subr.mxu0 0.0
    %654 = vmatpush1.msra.mxu0 %v621
    %655 = vmatprep.subr.mxu0 0.0
    %656 = vmatpush1.msra.mxu0 %v622
    %657 = vmatprep.subr.mxu0 0.0
    %658 = vmatpush1.msra.mxu0 %v623
    %659 = vmatprep.subr.mxu0 0.0
    %660 = vmatpush1.msra.mxu0 %v624
    %661 = vmatprep.subr.mxu0 0.0
    %662 = vmatpush1.msra.mxu0 %v625
    %663 = vmatprep.subr.mxu0 0.0
    %664 = vmatpush1.msra.mxu0 0.0
    %665 = vmatprep.subr.mxu0 0.0
    %666 = vmatpush1.msra.mxu0 0.0
    %667 = vmatprep.subr.mxu0 0.0
    %668 = vmatpush1.msra.mxu0 0.0
    %669 = vmatprep.subr.mxu0 0.0
    %670 = vmatpush1.msra.mxu0 0.0
    %671 = vmatprep.subr.mxu0 0.0
    %672 = vmatpush1.msra.mxu0 0.0
    %673 = vmatprep.subr.mxu0 0.0
    %674 = vmatpush1.msra.mxu0 0.0
    %675 = vmatprep.subr.mxu0 0.0
    %676 = vmatpush1.msra.mxu0 0.0
    %677 = vmatprep.subr.mxu0 0.0
    %678 = vmatpush1.msra.mxu0 0.0
    %679 = vmatprep.subr.mxu0 0.0
    %680 = vmatpush1.msra.mxu0 0.0
    %681 = vmatprep.subr.mxu0 0.0
    %682 = vmatpush1.msra.mxu0 0.0
    %683 = vmatprep.subr.mxu0 0.0
    %684 = vmatpush1.msra.mxu0 0.0
    %685 = vmatprep.subr.mxu0 0.0
    %686 = vmatpush1.msra.mxu0 0.0
    %687 = vmatprep.subr.mxu0 0.0
    %688 = vmatpush1.msra.mxu0 0.0
    %689 = vmatprep.subr.mxu0 0.0
    %690 = vmatpush1.msra.mxu0 0.0
    %691 = vmatprep.subr.mxu0 0.0
    %692 = vmatpush1.msra.mxu0 0.0
    %693 = vmatprep.subr.mxu0 0.0
    %694 = vmatpush1.msra.mxu0 0.0
    %695 = vmatprep.mubr.f32.mxu0 0.0
    %696 = vmatmul.mubr.f32.gmra.mrb[0].mxu0 %v626
    %v697 = vpop.f32.mrb[0].mxu0
    %v698 = vadd.f32 %v629, %v697
    %v699 = vpop.f32.mrb[0].mxu0
    %700 = vdwg.mxu0
    %701 = vst [vmem:[%s5] sm:$0xff] %v698
    // Predicated region
    $region34: #{mlp_forward.1} parent=1 // pred_check
      _
    $region35: #{mlp_forward.1} parent=1 // pred_check_branch
      %703 = sbr.rel (0) target = $region37
    $region36: #{mlp_forward.1} parent=1 // pred_region
      _
    $region37: #{mlp_forward.1} parent=1 // pred_fallthru
      _
    // Predicated region
    $region38: #{mlp_forward.1} parent=1 // pred_check
      _
    $region39: #{mlp_forward.1} parent=1 // pred_check_branch
      %705 = sbr.rel (0) target = $region41
    $region40: #{mlp_forward.1} parent=1 // pred_region
      _
    $region41: #{mlp_forward.1} parent=1 // pred_fallthru
      _
    %706 = vsyncpa [#allocation3], 1
    %707 = vsyncpa [#allocation5], 1

</llo_original>
